<compile_context>
chip_gen: v7x
topology: tpu7x:2x2x1
jax: 0.10.0
libtpu: 0.0.40
codegen_flags: <defaults>
</compile_context>

<pallas_src>
import jax
import jax.numpy as jnp
from jax.experimental import pallas as pl
from jax.experimental.pallas import tpu as pltpu


HIDDEN_PAD = 128   # lane-dense working width for hidden features (>= hidden_dim)
OUT_PAD = 128      # lane-dense width for the head output (>= output_dim)


# ----------------------------- fused Pallas kernel -----------------------------


def _fused_forward_kernel(a_ref, x_ref, w_ref, b_ref, hwx_ref, hbias_ref, o_ref):
    """Whole forward for ONE graph, fully resident in VMEM.

    Per layer l (merged lin_rel / lin_root matmul):
        agg = A_g @ h                               (MXU, f32 accumulate)
        h   = relu([agg, h] @ W_stack[l] + b[l])    (MXU, f32 epilogue)
    Head:
        out = h @ W_x + per_graph_bias              (lane-dense 128-wide store)
    """
    num_layers = w_ref.shape[0]
    h = x_ref[...]                                              # (P, Hp) bf16
    for l in range(num_layers):                                 # small static trip count
        agg = jnp.dot(a_ref[...], h, preferred_element_type=jnp.float32)
        cat = jnp.concatenate([agg.astype(jnp.bfloat16), h], axis=-1)   # (P, 2*Hp)
        hf = jnp.dot(cat, w_ref[l], preferred_element_type=jnp.float32)
        hf = hf + b_ref[l]                                      # f32 epilogue (v5e-safe)
        h = jnp.maximum(hf, 0.0).astype(jnp.bfloat16)
        # F.dropout(p, training=False) == identity in eval mode.
    out = jnp.dot(h, hwx_ref[...], preferred_element_type=jnp.float32)
    o_ref[...] = out + hbias_ref[...]                           # (P, OUT_PAD) f32, unmasked vst


# ------------------------------- forward glue ---------------------------------


def obm_graphconv_forward(x, edge_index, edge_attr, graph_features, num_graphs, params):
    """Mirrors OBM_GraphConv.forward for head='regression', eval mode."""
    n, f = x.shape
    assert n % num_graphs == 0, "contiguous equal-size graphs assumed (PyG batch)"
    p = n // num_graphs
    output_dim = params["output_dim"]

    # --- glue (plain JAX): block-diagonal densification of the sparse graph.
    # GraphConv aggregates messages src -> dst with aggr='add' (duplicate edges
    # sum). Edges never cross graphs, so only the per-graph diagonal blocks of
    # the adjacency are built: (num_graphs, P, P) instead of (N, N).
    src = edge_index[0]
    dst = edge_index[1]
    adj = (jnp.zeros((num_graphs, p, p), jnp.float32)
           .at[dst // p, dst % p, src % p].add(edge_attr)
           .astype(jnp.bfloat16))

    # Zero-pad node features to the lane-dense working width (padding columns
    # hit zero weight rows, so the math is exact).
    xp = jnp.zeros((num_graphs, p, HIDDEN_PAD), jnp.bfloat16)
    xp = xp.at[:, :, :f].set(x.reshape(num_graphs, p, f).astype(jnp.bfloat16))

    # Per-graph head bias = graph_features_g @ W_gf + b_head (tiny, computed
    # once per graph; replaces the (N, gfd) repeat + matmul of the original).
    if graph_features is not None and graph_features.shape[0] > 0:
        gf_contrib = (graph_features.T.astype(jnp.float32) @ params["head_w_gf"]
                      + params["head_b"])                      # (G, output_dim)
    else:
        gf_contrib = jnp.broadcast_to(params["head_b"], (num_graphs, output_dim))
    head_bias = jnp.zeros((num_graphs, 1, OUT_PAD), jnp.float32)
    head_bias = head_bias.at[:, 0, :output_dim].set(gf_contrib)

    def full(shape):
        return pl.BlockSpec(shape, lambda g: (0,) * len(shape))

    def per_graph(shape2d):
        return pl.BlockSpec((None,) + shape2d, lambda g: (g, 0, 0))

    out = pl.pallas_call(
        _fused_forward_kernel,
        grid=(num_graphs,),
        in_specs=[
            per_graph((p, p)),                      # adjacency block of graph g (bf16)
            per_graph((p, HIDDEN_PAD)),             # padded node features of graph g (bf16)
            full(params["w_all"].shape),            # stacked [W_rel; W_root] per layer (bf16)
            full(params["b_all"].shape),            # per-layer lin_rel bias (f32)
            full(params["head_w_x"].shape),         # padded head weight for node features (bf16)
            per_graph((1, OUT_PAD)),                # per-graph head bias (graph feats + bias, f32)
        ],
        out_specs=per_graph((p, OUT_PAD)),
        out_shape=jax.ShapeDtypeStruct((num_graphs, p, OUT_PAD), jnp.float32),
        compiler_params=pltpu.CompilerParams(
            dimension_semantics=("parallel",),       # use both TensorCores on v7x
            vmem_limit_bytes=48 * 1024 * 1024,       # below v7x's 64 MiB physical VMEM
        ),
    )(adj, xp, params["w_all"], params["b_all"], params["head_w_x"], head_bias)

    # Strip lane padding, back to (N, output_dim).
    return out.reshape(n, OUT_PAD)[:, :output_dim]


# ------------------------------- parameters -----------------------------------


def init_params(key, input_dim, hidden_dim, graph_feature_dim, output_dim, num_layers):
    """Synthetic params at the torch module's logical shapes, packed/zero-padded
    into the stacked, lane-dense layout the fused kernel consumes."""
    assert hidden_dim <= HIDDEN_PAD and output_dim <= OUT_PAD
    assert input_dim <= HIDDEN_PAD

    w_all = jnp.zeros((num_layers, 2 * HIDDEN_PAD, HIDDEN_PAD), jnp.float32)
    b_all = jnp.zeros((num_layers, 1, HIDDEN_PAD), jnp.float32)
    in_dim = input_dim
    for l in range(num_layers):
        key, k1, k2, k3 = jax.random.split(key, 4)
        w_rel = jax.random.normal(k1, (in_dim, hidden_dim), jnp.float32) * 0.1
        w_root = jax.random.normal(k2, (in_dim, hidden_dim), jnp.float32) * 0.1
        b_rel = jax.random.normal(k3, (hidden_dim,), jnp.float32) * 0.1
        w_all = w_all.at[l, :in_dim, :hidden_dim].set(w_rel)                         # lin_rel
        w_all = w_all.at[l, HIDDEN_PAD:HIDDEN_PAD + in_dim, :hidden_dim].set(w_root)  # lin_root
        b_all = b_all.at[l, 0, :hidden_dim].set(b_rel)
        in_dim = hidden_dim

    key, k1, k2, k3 = jax.random.split(key, 4)
    head_w_x = jnp.zeros((HIDDEN_PAD, OUT_PAD), jnp.float32)
    head_w_x = head_w_x.at[:hidden_dim, :output_dim].set(
        jax.random.normal(k1, (hidden_dim, output_dim), jnp.float32) * 0.1)
    head_w_gf = jax.random.normal(k2, (graph_feature_dim, output_dim), jnp.float32) * 0.1
    head_b = jax.random.normal(k3, (output_dim,), jnp.float32) * 0.1

    return {
        "w_all": w_all.astype(jnp.bfloat16),
        "b_all": b_all,                               # f32 (epilogue stays f32)
        "head_w_x": head_w_x.astype(jnp.bfloat16),
        "head_w_gf": head_w_gf,                       # logical shape, used in glue only
        "head_b": head_b,
        "output_dim": output_dim,
    }


# ---------------------------------- main ---------------------------------------

if __name__ == "__main__":
    # Small, module-consistent shapes.
    num_graphs = 2
    nodes_per_graph = 8
    N = num_graphs * nodes_per_graph          # 16 nodes total
    node_feature_dim = 8
    hidden_dim = 32
    graph_feature_dim = 2
    output_dim = 1
    num_layers = 3
    E = 64                                    # total number of edges

    key = jax.random.PRNGKey(0)
    key, kx, ks, kd, kw, kg, kp = jax.random.split(key, 7)

    x = jax.random.normal(kx, (N, node_feature_dim), jnp.float32)

    # Random edges, constrained to stay within each graph (PyG batch semantics).
    graph_of_edge = jnp.repeat(jnp.arange(num_graphs), E // num_graphs)
    src_local = jax.random.randint(ks, (E,), 0, nodes_per_graph)
    dst_local = jax.random.randint(kd, (E,), 0, nodes_per_graph)
    edge_index = jnp.stack(
        [graph_of_edge * nodes_per_graph + src_local,
         graph_of_edge * nodes_per_graph + dst_local], axis=0
    ).astype(jnp.int32)                       # (2, E)
    edge_attr = jax.random.uniform(kw, (E,), jnp.float32)  # scalar edge weights

    # graph_features: (graph_feature_dim, num_graphs), as produced by _extract_batch.
    graph_features = jax.random.normal(kg, (graph_feature_dim, num_graphs), jnp.float32)

    params = init_params(
        kp, node_feature_dim, hidden_dim, graph_feature_dim, output_dim, num_layers
    )

    # TODO(synk): head='meta' (hstack of batch.base_model_preds) and
    # batch_select_match_nodes (greedy decode helper) are outside the forward
    # hot path and are not implemented here.
    out = obm_graphconv_forward(x, edge_index, edge_attr, graph_features, num_graphs, params)
    out = jax.block_until_ready(out)
    assert out.shape == (N, output_dim)
    print("KERNEL_OK")
</pallas_src>

<mosaic_0001>
module attributes {stable_mosaic.version = 11 : i64} {
  func.func @_fused_forward_kernel(%arg0: i32, %arg1: memref<1x8x8xbf16, #tpu.memory_space<vmem>>, %arg2: memref<1x8x128xbf16, #tpu.memory_space<vmem>>, %arg3: memref<3x256x128xbf16, #tpu.memory_space<vmem>>, %arg4: memref<3x1x128xf32, #tpu.memory_space<vmem>>, %arg5: memref<128x128xbf16, #tpu.memory_space<vmem>>, %arg6: memref<1x1x128xf32, #tpu.memory_space<vmem>>, %arg7: memref<1x8x128xf32, #tpu.memory_space<vmem>>) attributes {dimension_semantics = [#tpu.dimension_semantics<parallel>], iteration_bounds = array<i64: 2>, scalar_prefetch = 0 : i64, scratch_operands = 0 : i64, tpu.core_type = #tpu.core_type<tc>, window_params = [{transform_indices = @transform_0, window_bounds = array<i64: 1, 8, 8>}, {transform_indices = @transform_1, window_bounds = array<i64: 1, 8, 128>}, {pipeline_mode = #tpu.pipeline_mode<synchronous>, transform_indices = @transform_2, window_bounds = array<i64: 3, 256, 128>}, {pipeline_mode = #tpu.pipeline_mode<synchronous>, transform_indices = @transform_3, window_bounds = array<i64: 3, 1, 128>}, {pipeline_mode = #tpu.pipeline_mode<synchronous>, transform_indices = @transform_4, window_bounds = array<i64: 128, 128>}, {transform_indices = @transform_5, window_bounds = array<i64: 1, 1, 128>}, {transform_indices = @transform_6, window_bounds = array<i64: 1, 8, 128>}]} {
    %c0 = arith.constant 0 : index
    %c0_0 = arith.constant 0 : index
    %c0_1 = arith.constant 0 : index
    %0 = vector.load %arg2[%c0, %c0_0, %c0_1] : memref<1x8x128xbf16, #tpu.memory_space<vmem>>, vector<1x8x128xbf16>
    %1 = vector.shape_cast %0 : vector<1x8x128xbf16> to vector<8x128xbf16>
    %c0_2 = arith.constant 0 : index
    %c0_3 = arith.constant 0 : index
    %c0_4 = arith.constant 0 : index
    %2 = vector.load %arg1[%c0_2, %c0_3, %c0_4] : memref<1x8x8xbf16, #tpu.memory_space<vmem>>, vector<1x8x8xbf16>
    %3 = vector.shape_cast %2 : vector<1x8x8xbf16> to vector<8x8xbf16>
    %cst = arith.constant dense<0.000000e+00> : vector<8x128xf32>
    %4 = tpu.matmul %3, %1, %cst {dimension_numbers = #tpu.dot_dimension_numbers<[1], [0], [0], [1], [0, 0, 1, 1], [], []>} : vector<8x8xbf16>, vector<8x128xbf16>, vector<8x128xf32> -> vector<8x128xf32>
    %5 = arith.truncf %4 : vector<8x128xf32> to vector<8x128xbf16>
    %6 = tpu.concatenate %5, %1 in 1 : vector<8x128xbf16>, vector<8x128xbf16> -> vector<8x256xbf16>
    %c0_5 = arith.constant 0 : index
    %c0_6 = arith.constant 0 : index
    %c0_7 = arith.constant 0 : index
    %7 = vector.load %arg3[%c0_5, %c0_6, %c0_7] : memref<3x256x128xbf16, #tpu.memory_space<vmem>>, vector<1x256x128xbf16>
    %8 = vector.shape_cast %7 : vector<1x256x128xbf16> to vector<256x128xbf16>
    %cst_8 = arith.constant dense<0.000000e+00> : vector<8x128xf32>
    %9 = tpu.matmul %6, %8, %cst_8 {dimension_numbers = #tpu.dot_dimension_numbers<[1], [0], [0], [1], [0, 0, 1, 1], [], []>} : vector<8x256xbf16>, vector<256x128xbf16>, vector<8x128xf32> -> vector<8x128xf32>
    %c0_9 = arith.constant 0 : index
    %c0_10 = arith.constant 0 : index
    %c0_11 = arith.constant 0 : index
    %10 = vector.load %arg4[%c0_9, %c0_10, %c0_11] : memref<3x1x128xf32, #tpu.memory_space<vmem>>, vector<1x1x128xf32>
    %11 = vector.shape_cast %10 : vector<1x1x128xf32> to vector<1x128xf32>
    %12 = vector.broadcast %11 : vector<1x128xf32> to vector<8x128xf32>
    %13 = arith.addf %9, %12 : vector<8x128xf32>
    %cst_12 = arith.constant 0.000000e+00 : f32
    %14 = vector.broadcast %cst_12 : f32 to vector<8x128xf32>
    %15 = arith.maximumf %13, %14 : vector<8x128xf32>
    %16 = arith.truncf %15 : vector<8x128xf32> to vector<8x128xbf16>
    %c0_13 = arith.constant 0 : index
    %c0_14 = arith.constant 0 : index
    %c0_15 = arith.constant 0 : index
    %17 = vector.load %arg1[%c0_13, %c0_14, %c0_15] : memref<1x8x8xbf16, #tpu.memory_space<vmem>>, vector<1x8x8xbf16>
    %18 = vector.shape_cast %17 : vector<1x8x8xbf16> to vector<8x8xbf16>
    %cst_16 = arith.constant dense<0.000000e+00> : vector<8x128xf32>
    %19 = tpu.matmul %18, %16, %cst_16 {dimension_numbers = #tpu.dot_dimension_numbers<[1], [0], [0], [1], [0, 0, 1, 1], [], []>} : vector<8x8xbf16>, vector<8x128xbf16>, vector<8x128xf32> -> vector<8x128xf32>
    %20 = arith.truncf %19 : vector<8x128xf32> to vector<8x128xbf16>
    %21 = tpu.concatenate %20, %16 in 1 : vector<8x128xbf16>, vector<8x128xbf16> -> vector<8x256xbf16>
    %c1 = arith.constant 1 : index
    %c0_17 = arith.constant 0 : index
    %c0_18 = arith.constant 0 : index
    %22 = vector.load %arg3[%c1, %c0_17, %c0_18] : memref<3x256x128xbf16, #tpu.memory_space<vmem>>, vector<1x256x128xbf16>
    %23 = vector.shape_cast %22 : vector<1x256x128xbf16> to vector<256x128xbf16>
    %cst_19 = arith.constant dense<0.000000e+00> : vector<8x128xf32>
    %24 = tpu.matmul %21, %23, %cst_19 {dimension_numbers = #tpu.dot_dimension_numbers<[1], [0], [0], [1], [0, 0, 1, 1], [], []>} : vector<8x256xbf16>, vector<256x128xbf16>, vector<8x128xf32> -> vector<8x128xf32>
    %c1_20 = arith.constant 1 : index
    %c0_21 = arith.constant 0 : index
    %c0_22 = arith.constant 0 : index
    %25 = vector.load %arg4[%c1_20, %c0_21, %c0_22] : memref<3x1x128xf32, #tpu.memory_space<vmem>>, vector<1x1x128xf32>
    %26 = vector.shape_cast %25 : vector<1x1x128xf32> to vector<1x128xf32>
    %27 = vector.broadcast %26 : vector<1x128xf32> to vector<8x128xf32>
    %28 = arith.addf %24, %27 : vector<8x128xf32>
    %cst_23 = arith.constant 0.000000e+00 : f32
    %29 = vector.broadcast %cst_23 : f32 to vector<8x128xf32>
    %30 = arith.maximumf %28, %29 : vector<8x128xf32>
    %31 = arith.truncf %30 : vector<8x128xf32> to vector<8x128xbf16>
    %c0_24 = arith.constant 0 : index
    %c0_25 = arith.constant 0 : index
    %c0_26 = arith.constant 0 : index
    %32 = vector.load %arg1[%c0_24, %c0_25, %c0_26] : memref<1x8x8xbf16, #tpu.memory_space<vmem>>, vector<1x8x8xbf16>
    %33 = vector.shape_cast %32 : vector<1x8x8xbf16> to vector<8x8xbf16>
    %cst_27 = arith.constant dense<0.000000e+00> : vector<8x128xf32>
    %34 = tpu.matmul %33, %31, %cst_27 {dimension_numbers = #tpu.dot_dimension_numbers<[1], [0], [0], [1], [0, 0, 1, 1], [], []>} : vector<8x8xbf16>, vector<8x128xbf16>, vector<8x128xf32> -> vector<8x128xf32>
    %35 = arith.truncf %34 : vector<8x128xf32> to vector<8x128xbf16>
    %36 = tpu.concatenate %35, %31 in 1 : vector<8x128xbf16>, vector<8x128xbf16> -> vector<8x256xbf16>
    %c2 = arith.constant 2 : index
    %c0_28 = arith.constant 0 : index
    %c0_29 = arith.constant 0 : index
    %37 = vector.load %arg3[%c2, %c0_28, %c0_29] : memref<3x256x128xbf16, #tpu.memory_space<vmem>>, vector<1x256x128xbf16>
    %38 = vector.shape_cast %37 : vector<1x256x128xbf16> to vector<256x128xbf16>
    %cst_30 = arith.constant dense<0.000000e+00> : vector<8x128xf32>
    %39 = tpu.matmul %36, %38, %cst_30 {dimension_numbers = #tpu.dot_dimension_numbers<[1], [0], [0], [1], [0, 0, 1, 1], [], []>} : vector<8x256xbf16>, vector<256x128xbf16>, vector<8x128xf32> -> vector<8x128xf32>
    %c2_31 = arith.constant 2 : index
    %c0_32 = arith.constant 0 : index
    %c0_33 = arith.constant 0 : index
    %40 = vector.load %arg4[%c2_31, %c0_32, %c0_33] : memref<3x1x128xf32, #tpu.memory_space<vmem>>, vector<1x1x128xf32>
    %41 = vector.shape_cast %40 : vector<1x1x128xf32> to vector<1x128xf32>
    %42 = vector.broadcast %41 : vector<1x128xf32> to vector<8x128xf32>
    %43 = arith.addf %39, %42 : vector<8x128xf32>
    %cst_34 = arith.constant 0.000000e+00 : f32
    %44 = vector.broadcast %cst_34 : f32 to vector<8x128xf32>
    %45 = arith.maximumf %43, %44 : vector<8x128xf32>
    %46 = arith.truncf %45 : vector<8x128xf32> to vector<8x128xbf16>
    %c0_35 = arith.constant 0 : index
    %c0_36 = arith.constant 0 : index
    %47 = vector.load %arg5[%c0_35, %c0_36] : memref<128x128xbf16, #tpu.memory_space<vmem>>, vector<128x128xbf16>
    %cst_37 = arith.constant dense<0.000000e+00> : vector<8x128xf32>
    %48 = tpu.matmul %46, %47, %cst_37 {dimension_numbers = #tpu.dot_dimension_numbers<[1], [0], [0], [1], [0, 0, 1, 1], [], []>} : vector<8x128xbf16>, vector<128x128xbf16>, vector<8x128xf32> -> vector<8x128xf32>
    %c0_38 = arith.constant 0 : index
    %c0_39 = arith.constant 0 : index
    %c0_40 = arith.constant 0 : index
    %49 = vector.load %arg6[%c0_38, %c0_39, %c0_40] : memref<1x1x128xf32, #tpu.memory_space<vmem>>, vector<1x1x128xf32>
    %50 = vector.shape_cast %49 : vector<1x1x128xf32> to vector<1x128xf32>
    %51 = vector.broadcast %50 : vector<1x128xf32> to vector<8x128xf32>
    %52 = arith.addf %48, %51 : vector<8x128xf32>
    %c0_41 = arith.constant 0 : index
    %c0_42 = arith.constant 0 : index
    %c0_43 = arith.constant 0 : index
    %53 = vector.load %arg7[%c0_41, %c0_42, %c0_43] : memref<1x8x128xf32, #tpu.memory_space<vmem>>, vector<1x8x128xf32>
    %54 = vector.shape_cast %53 : vector<1x8x128xf32> to vector<8x128xf32>
    %55 = vector.shape_cast %52 : vector<8x128xf32> to vector<1x8x128xf32>
    tpu.vector_store %arg7[%c0_41, %c0_42, %c0_43], %55 {strides = array<i32>} : memref<1x8x128xf32, #tpu.memory_space<vmem>>, vector<1x8x128xf32>,
    return
  }
  func.func @transform_0(%arg0: i32) -> (i32, i32, i32) {
    %c0_i32 = arith.constant 0 : i32
    %c0_i32_0 = arith.constant 0 : i32
    %c0_i32_1 = arith.constant 0 : i32
    return %arg0, %c0_i32, %c0_i32_0 : i32, i32, i32
  }
  func.func @transform_1(%arg0: i32) -> (i32, i32, i32) {
    %c0_i32 = arith.constant 0 : i32
    %c0_i32_0 = arith.constant 0 : i32
    %c0_i32_1 = arith.constant 0 : i32
    return %arg0, %c0_i32, %c0_i32_0 : i32, i32, i32
  }
  func.func @transform_2(%arg0: i32) -> (i32, i32, i32) {
    %c0_i32 = arith.constant 0 : i32
    %c0_i32_0 = arith.constant 0 : i32
    %c0_i32_1 = arith.constant 0 : i32
    %c0_i32_2 = arith.constant 0 : i32
    return %c0_i32, %c0_i32_0, %c0_i32_1 : i32, i32, i32
  }
  func.func @transform_3(%arg0: i32) -> (i32, i32, i32) {
    %c0_i32 = arith.constant 0 : i32
    %c0_i32_0 = arith.constant 0 : i32
    %c0_i32_1 = arith.constant 0 : i32
    %c0_i32_2 = arith.constant 0 : i32
    return %c0_i32, %c0_i32_0, %c0_i32_1 : i32, i32, i32
  }
  func.func @transform_4(%arg0: i32) -> (i32, i32) {
    %c0_i32 = arith.constant 0 : i32
    %c0_i32_0 = arith.constant 0 : i32
    %c0_i32_1 = arith.constant 0 : i32
    return %c0_i32, %c0_i32_0 : i32, i32
  }
  func.func @transform_5(%arg0: i32) -> (i32, i32, i32) {
    %c0_i32 = arith.constant 0 : i32
    %c0_i32_0 = arith.constant 0 : i32
    %c0_i32_1 = arith.constant 0 : i32
    return %arg0, %c0_i32, %c0_i32_0 : i32, i32, i32
  }
  func.func @transform_6(%arg0: i32) -> (i32, i32, i32) {
    %c0_i32 = arith.constant 0 : i32
    %c0_i32_0 = arith.constant 0 : i32
    %c0_i32_1 = arith.constant 0 : i32
    return %arg0, %c0_i32, %c0_i32_0 : i32, i32, i32
  }
}

</mosaic_0001>

<llo_original>
// kernel: tpu_custom_call.1
$region0: #{tpu_custom_call.1}
  #allocation0 [shape = 'u32[]', space=smem, size = 0x4, offset = 0x4, fixed_abs, tag = 'smem constant byte address 0x4 - core index']
  #allocation1 [shape = 'u32[144,128]{1,0:T(1,128)}', space=vmem, size = 0x12000, scoped, tag = 'internal scratch']
  %s0 = inlined_call_operand.hbm [shape: bf16[2,8,8], index: 0, kind: input, shape index: {}]
  %s1 = inlined_call_operand.hbm [shape: bf16[2,8,128], index: 1, kind: input, shape index: {}]
  %s2 = inlined_call_operand.hbm [shape: bf16[3,256,128], index: 2, kind: input, shape index: {}]
  %s3 = inlined_call_operand.vmem [shape: f32[3,1,128], index: 3, kind: input, shape index: {}]
  %s4 = inlined_call_operand.hbm [shape: bf16[128,128], index: 4, kind: input, shape index: {}]
  %s5 = inlined_call_operand.vmem [shape: f32[2,1,128], index: 5, kind: input, shape index: {}]
  %s6 = inlined_call_operand.hbm [shape: f32[2,8,128], index: 6, kind: output, shape index: {}]
  %s7 = sld [smem:[#allocation0]]
  $region73: #{tpu_custom_call.1} parent=0
    _
  %s9 = ssub.s32 1, %s7
  %s10 = scalar_select 0, %s9, %s7
  $region1: #{tpu_custom_call.1} parent=0
    #allocation2 [shape = 'u8[4096]{0}', space=vmem, size = 0x1000, scoped, tag = 'input window, operand 0']
    #allocation3 [shape = 's32[2]{0}', space=sflag, size = 0x8, scoped, tag = 'scoped memory for tpu_custom_call.1']
    #allocation4 [shape = 's32[2]{0}', space=sflag, size = 0x8, scoped, tag = 'scoped memory for tpu_custom_call.1']
    #allocation5 [shape = 'u8[4096]{0}', space=vmem, size = 0x1000, scoped, tag = 'input window, operand 1']
    #allocation6 [shape = 's32[2]{0}', space=sflag, size = 0x8, scoped, tag = 'scoped memory for tpu_custom_call.1']
    #allocation7 [shape = 'u8[196608]{0}', space=vmem, size = 0x30000, scoped, tag = 'input window, operand 2, single buffered']
    #allocation8 [shape = 'u8[32768]{0}', space=vmem, size = 0x8000, scoped, tag = 'input window, operand 4, single buffered']
    #allocation9 [shape = 's32[1]{0}', space=sflag, size = 0x4, scoped, tag = 'scoped memory for tpu_custom_call.1']
    #allocation10 [shape = 'u8[8192]{0}', space=vmem, size = 0x2000, scoped, tag = 'output window, operand 0']
    %11 = vsyncpa [#allocation3], 0
    %s12 = scalar_lea.sflag [#allocation3], 1
    %13 = vsyncpa %s12, 0
    %14 = vsyncpa [#allocation6], 0
    %s15 = scalar_lea.sflag [#allocation6], 1
    %16 = vsyncpa %s15, 0
    %17 = vsyncpa [#allocation9], 0
    %18 = vsyncpa [#allocation4], 0
    %s19 = scalar_lea.sflag [#allocation4], 1
    %20 = vsyncpa %s19, 0
    loop: start=0, step=1, limit=4
    $region2: #{tpu_custom_call.1} parent=1 // loop_pre_header
      _
    $region3: #{tpu_custom_call.1} parent=1 // loop_header
      %s22 = sphi 0, %s26
      %p23 = scmp.ge.s32.totalorder %s22, 4
      %s32 = sphi 0, %s34
      %s35 = sphi 0, %s32
      %s36 = sphi 0, %s35
      %s52 = sphi 0, %s36
      %s58 = sphi 0, %s60
      %s61 = sphi 0, %s58
      %s62 = sphi 0, %s61
      %s78 = sphi 0, %s62
      %s82 = sphi 0, %s82
      %s84 = sphi 0, %s82
      %s85 = sphi 0, %s84
      %s99 = sphi 0, %s85
      %s103 = sphi 0, %s103
      %s105 = sphi 0, %s103
      %s106 = sphi 0, %s105
      %s120 = sphi 0, %s106
      %s124 = sphi 0, %s124
      %s126 = sphi 0, %s124
      %s127 = sphi 0, %s126
      %s141 = sphi 0, %s127
      %s147 = sphi 0, %s149
      %s150 = sphi 0, %s147
      %s151 = sphi 0, %s150
      %s167 = sphi 0, %s151
      %s173 = sphi 0, %s175
      %s176 = sphi 0, %s173
      %s177 = sphi 0, %s176
      %s193 = sphi 0, %s177
    $region4: #{tpu_custom_call.1} parent=1 // loop_header_branch
      %25 = sbr.rel (%p23) target = $region8
    $region5: #{tpu_custom_call.1} parent=1 // loop_body
      %s27 = ssub.s32 %s22, 1
      %s28 = ssub.s32 %s22, 2
      %s29 = sadd.s32 %s22, 1
      %s30 = ssub.s32 %s22, %s29
      %p31 = scmp.eq.s32.totalorder %s30, 0
      %s33 = sadd.s32 %s32, 1
      %s34 = scalar_select %p31, %s32, %s33
      %p37 = pneg %p31
      %p38 = scmp.eq.s32.totalorder %s22, 1
      %p39 = por %p37, %p38
      %p40 = scmp.ne.s32.totalorder %s32, %s35
      %p41 = scmp.eq.s32.totalorder %s22, 0
      %p42 = por %p40, %p41
      %p43 = scmp.ne.s32.totalorder %s32, %s35
      %p44 = scmp.eq.s32.totalorder %s27, 1
      %p45 = por %p43, %p44
      %p46 = scmp.ne.s32.totalorder %s35, %s36
      %p47 = scmp.eq.s32.totalorder %s27, 0
      %p48 = por %p46, %p47
      %p49 = scmp.ne.s32.totalorder %s35, %s36
      %p50 = scmp.eq.s32.totalorder %s28, 1
      %p51 = por %p49, %p50
      %p53 = scmp.ne.s32.totalorder %s36, %s52
      %p54 = scmp.eq.s32.totalorder %s28, 0
      %p55 = por %p53, %p54
      %s56 = ssub.s32 %s22, %s29
      %p57 = scmp.eq.s32.totalorder %s56, 0
      %s59 = sadd.s32 %s58, 1
      %s60 = scalar_select %p57, %s58, %s59
      %p63 = pneg %p57
      %p64 = scmp.eq.s32.totalorder %s22, 1
      %p65 = por %p63, %p64
      %p66 = scmp.ne.s32.totalorder %s58, %s61
      %p67 = scmp.eq.s32.totalorder %s22, 0
      %p68 = por %p66, %p67
      %p69 = scmp.ne.s32.totalorder %s58, %s61
      %p70 = scmp.eq.s32.totalorder %s27, 1
      %p71 = por %p69, %p70
      %p72 = scmp.ne.s32.totalorder %s61, %s62
      %p73 = scmp.eq.s32.totalorder %s27, 0
      %p74 = por %p72, %p73
      %p75 = scmp.ne.s32.totalorder %s61, %s62
      %p76 = scmp.eq.s32.totalorder %s28, 1
      %p77 = por %p75, %p76
      %p79 = scmp.ne.s32.totalorder %s62, %s78
      %p80 = scmp.eq.s32.totalorder %s28, 0
      %p81 = por %p79, %p80
      %s83 = sadd.s32 %s82, 1
      %p86 = scmp.eq.s32.totalorder %s22, 1
      %p87 = scmp.ne.s32.totalorder %s82, %s84
      %p88 = scmp.eq.s32.totalorder %s22, 0
      %p89 = por %p87, %p88
      %p90 = scmp.ne.s32.totalorder %s82, %s84
      %p91 = scmp.eq.s32.totalorder %s27, 1
      %p92 = por %p90, %p91
      %p93 = scmp.ne.s32.totalorder %s84, %s85
      %p94 = scmp.eq.s32.totalorder %s27, 0
      %p95 = por %p93, %p94
      %p96 = scmp.ne.s32.totalorder %s84, %s85
      %p97 = scmp.eq.s32.totalorder %s28, 1
      %p98 = por %p96, %p97
      %p100 = scmp.ne.s32.totalorder %s85, %s99
      %p101 = scmp.eq.s32.totalorder %s28, 0
      %p102 = por %p100, %p101
      %s104 = sadd.s32 %s103, 1
      %p107 = scmp.eq.s32.totalorder %s22, 1
      %p108 = scmp.ne.s32.totalorder %s103, %s105
      %p109 = scmp.eq.s32.totalorder %s22, 0
      %p110 = por %p108, %p109
      %p111 = scmp.ne.s32.totalorder %s103, %s105
      %p112 = scmp.eq.s32.totalorder %s27, 1
      %p113 = por %p111, %p112
      %p114 = scmp.ne.s32.totalorder %s105, %s106
      %p115 = scmp.eq.s32.totalorder %s27, 0
      %p116 = por %p114, %p115
      %p117 = scmp.ne.s32.totalorder %s105, %s106
      %p118 = scmp.eq.s32.totalorder %s28, 1
      %p119 = por %p117, %p118
      %p121 = scmp.ne.s32.totalorder %s106, %s120
      %p122 = scmp.eq.s32.totalorder %s28, 0
      %p123 = por %p121, %p122
      %s125 = sadd.s32 %s124, 1
      %p128 = scmp.eq.s32.totalorder %s22, 1
      %p129 = scmp.ne.s32.totalorder %s124, %s126
      %p130 = scmp.eq.s32.totalorder %s22, 0
      %p131 = por %p129, %p130
      %p132 = scmp.ne.s32.totalorder %s124, %s126
      %p133 = scmp.eq.s32.totalorder %s27, 1
      %p134 = por %p132, %p133
      %p135 = scmp.ne.s32.totalorder %s126, %s127
      %p136 = scmp.eq.s32.totalorder %s27, 0
      %p137 = por %p135, %p136
      %p138 = scmp.ne.s32.totalorder %s126, %s127
      %p139 = scmp.eq.s32.totalorder %s28, 1
      %p140 = por %p138, %p139
      %p142 = scmp.ne.s32.totalorder %s127, %s141
      %p143 = scmp.eq.s32.totalorder %s28, 0
      %p144 = por %p142, %p143
      %s145 = ssub.s32 %s22, %s29
      %p146 = scmp.eq.s32.totalorder %s145, 0
      %s148 = sadd.s32 %s147, 1
      %s149 = scalar_select %p146, %s147, %s148
      %p152 = pneg %p146
      %p153 = scmp.eq.s32.totalorder %s22, 1
      %p154 = por %p152, %p153
      %p155 = scmp.ne.s32.totalorder %s147, %s150
      %p156 = scmp.eq.s32.totalorder %s22, 0
      %p157 = por %p155, %p156
      %p158 = scmp.ne.s32.totalorder %s147, %s150
      %p159 = scmp.eq.s32.totalorder %s27, 1
      %p160 = por %p158, %p159
      %p161 = scmp.ne.s32.totalorder %s150, %s151
      %p162 = scmp.eq.s32.totalorder %s27, 0
      %p163 = por %p161, %p162
      %p164 = scmp.ne.s32.totalorder %s150, %s151
      %p165 = scmp.eq.s32.totalorder %s28, 1
      %p166 = por %p164, %p165
      %p168 = scmp.ne.s32.totalorder %s151, %s167
      %p169 = scmp.eq.s32.totalorder %s28, 0
      %p170 = por %p168, %p169
      %s171 = ssub.s32 %s22, %s29
      %p172 = scmp.eq.s32.totalorder %s171, 0
      %s174 = sadd.s32 %s173, 1
      %s175 = scalar_select %p172, %s173, %s174
      %p178 = pneg %p172
      %p179 = scmp.eq.s32.totalorder %s22, 1
      %p180 = por %p178, %p179
      %p181 = scmp.ne.s32.totalorder %s173, %s176
      %p182 = scmp.eq.s32.totalorder %s22, 0
      %p183 = por %p181, %p182
      %p184 = scmp.ne.s32.totalorder %s173, %s176
      %p185 = scmp.eq.s32.totalorder %s27, 1
      %p186 = por %p184, %p185
      %p187 = scmp.ne.s32.totalorder %s176, %s177
      %p188 = scmp.eq.s32.totalorder %s27, 0
      %p189 = por %p187, %p188
      %p190 = scmp.ne.s32.totalorder %s176, %s177
      %p191 = scmp.eq.s32.totalorder %s28, 1
      %p192 = por %p190, %p191
      %p194 = scmp.ne.s32.totalorder %s177, %s193
      %p195 = scmp.eq.s32.totalorder %s28, 0
      %p196 = por %p194, %p195
      %p197 = scmp.le.s32.totalorder 1, %s22
      %p198 = scmp.lt.s32.totalorder %s22, 3
      %p199 = pnand %p197, %p198
      %p200 = pneg %p199
      // Predicated region
      $region9: #{tpu_custom_call.1} parent=5 // pred_check
        _
      $region10: #{tpu_custom_call.1} parent=5 // pred_check_branch
        %202 = sbr.rel (%p199) target = $region12
      $region11: #{tpu_custom_call.1} parent=5 // pred_region
        %s203 = ssub.s32 %s22, 1
        // Predicated region
        $region13: #{tpu_custom_call.1} parent=11 // pred_check
          %p204 = pneg %p95
        $region14: #{tpu_custom_call.1} parent=11 // pred_check_branch
          %206 = sbr.rel (%p204) target = $region16
        $region15: #{tpu_custom_call.1} parent=11 // pred_region
          %s208 = ssub.s32 6144, 6144
          %209 = vsyncadd [#allocation6], %s208
          %s210 = sshll.u32 [#allocation7], 4
          %s211 = int_to_ptr.vmem [resolvable:$true] %s210
          %216 = dma.hbm_to_vmem [thread:$0]  %s2, 6144, %s211, [#allocation6], 64, 64, 4
        $region16: #{tpu_custom_call.1} parent=11 // pred_fallthru
          _
        // Predicated region
        $region17: #{tpu_custom_call.1} parent=11 // pred_check
          %p217 = pneg %p116
        $region18: #{tpu_custom_call.1} parent=11 // pred_check_branch
          %219 = sbr.rel (%p217) target = $region20
        $region19: #{tpu_custom_call.1} parent=11 // pred_region
          _
        $region20: #{tpu_custom_call.1} parent=11 // pred_fallthru
          _
        // Predicated region
        $region21: #{tpu_custom_call.1} parent=11 // pred_check
          %p220 = pneg %p137
        $region22: #{tpu_custom_call.1} parent=11 // pred_check_branch
          %222 = sbr.rel (%p220) target = $region24
        $region23: #{tpu_custom_call.1} parent=11 // pred_region
          %s224 = ssub.s32 1024, 1024
          %225 = vsyncadd [#allocation9], %s224
          %s226 = sshll.u32 [#allocation8], 4
          %s227 = int_to_ptr.vmem [resolvable:$true] %s226
          %232 = dma.hbm_to_vmem [thread:$0]  %s4, 1024, %s227, [#allocation9], 64, 64, 4
        $region24: #{tpu_custom_call.1} parent=11 // pred_fallthru
          _
      $region12: #{tpu_custom_call.1} parent=5 // pred_fallthru
        _
      %p233 = scmp.lt.s32.totalorder %s22, 2
      // Predicated region
      $region25: #{tpu_custom_call.1} parent=5 // pred_check
        %p234 = pneg %p233
      $region26: #{tpu_custom_call.1} parent=5 // pred_check_branch
        %236 = sbr.rel (%p234) target = $region28
      $region27: #{tpu_custom_call.1} parent=5 // pred_region
        // Predicated region
        $region29: #{tpu_custom_call.1} parent=27 // pred_check
          %p237 = pneg %p42
        $region30: #{tpu_custom_call.1} parent=27 // pred_check_branch
          %239 = sbr.rel (%p237) target = $region32
        $region31: #{tpu_custom_call.1} parent=27 // pred_region
          %s240 = sand.u32 %s32, 1
          %s241 = scalar_lea.sflag [#allocation3], %s240
          %s242 = sand.u32 %s32, 1
          %s243 = smul.addr %s242, 4
          %s244 = scalar_lea.vmem [#allocation2], %s243
          %s246 = ssub.s32 64, 64
          %247 = vsyncadd %s241, %s246
          %s248 = smul.addr %s22, 64
          %s249 = scalar_lea.hbm %s0, %s248
          %s251 = sshll.u32 %s244, 4
          %s252 = int_to_ptr.vmem [resolvable:$true] %s251
          %254 = dma.hbm_to_vmem [thread:$0]  %s249, 64, %s252, %s241
        $region32: #{tpu_custom_call.1} parent=27 // pred_fallthru
          _
        // Predicated region
        $region33: #{tpu_custom_call.1} parent=27 // pred_check
          %p255 = pneg %p68
        $region34: #{tpu_custom_call.1} parent=27 // pred_check_branch
          %257 = sbr.rel (%p255) target = $region36
        $region35: #{tpu_custom_call.1} parent=27 // pred_region
          %s258 = sand.u32 %s22, 1
          %s259 = scalar_lea.sflag [#allocation6], %s258
          %s260 = sand.u32 %s58, 1
          %s261 = smul.addr %s260, 4
          %s262 = scalar_lea.vmem [#allocation5], %s261
          %s264 = ssub.s32 64, 64
          %265 = vsyncadd %s259, %s264
          %s266 = smul.addr %s22, 64
          %s267 = scalar_lea.hbm %s1, %s266
          %s269 = sshll.u32 %s262, 4
          %s270 = int_to_ptr.vmem [resolvable:$true] %s269
          %272 = dma.hbm_to_vmem [thread:$0]  %s267, 64, %s270, %s259
        $region36: #{tpu_custom_call.1} parent=27 // pred_fallthru
          _
        // Predicated region
        $region37: #{tpu_custom_call.1} parent=27 // pred_check
          %p273 = pneg %p157
        $region38: #{tpu_custom_call.1} parent=27 // pred_check_branch
          %275 = sbr.rel (%p273) target = $region40
        $region39: #{tpu_custom_call.1} parent=27 // pred_region
          %p276 = scmp.lt.s32.totalorder %s22, 1
          %s277 = scalar_select %p276, %s22, 1
          %s278 = scalar_lea.vmem %s5, %s277
        $region40: #{tpu_custom_call.1} parent=27 // pred_fallthru
          _
      $region28: #{tpu_custom_call.1} parent=5 // pred_fallthru
        _
      %p279 = scmp.le.s32.totalorder 1, %s22
      %p280 = scmp.lt.s32.totalorder %s22, 3
      %p281 = pnand %p279, %p280
      %p282 = pneg %p281
      // Predicated region
      $region41: #{tpu_custom_call.1} parent=5 // pred_check
        _
      $region42: #{tpu_custom_call.1} parent=5 // pred_check_branch
        %284 = sbr.rel (%p281) target = $region44
      $region43: #{tpu_custom_call.1} parent=5 // pred_region
        %s285 = ssub.s32 %s22, 1
        %s286 = sand.u32 %s35, 1
        %s287 = scalar_lea.sflag [#allocation3], %s286
        %s288 = sand.u32 %s35, 1
        %s289 = smul.addr %s288, 4
        %s290 = scalar_lea.vmem [#allocation2], %s289
        // Predicated region
        $region45: #{tpu_custom_call.1} parent=43 // pred_check
          %p291 = pneg %p48
        $region46: #{tpu_custom_call.1} parent=43 // pred_check_branch
          %293 = sbr.rel (%p291) target = $region48
        $region47: #{tpu_custom_call.1} parent=43 // pred_region
          %294 = dma.done %s287, 64
        $region48: #{tpu_custom_call.1} parent=43 // pred_fallthru
          _
        %s295 = sand.u32 %s27, 1
        %s296 = scalar_lea.sflag [#allocation6], %s295
        %s297 = sand.u32 %s61, 1
        %s298 = smul.addr %s297, 4
        %s299 = scalar_lea.vmem [#allocation5], %s298
        // Predicated region
        $region49: #{tpu_custom_call.1} parent=43 // pred_check
          %p300 = pneg %p74
        $region50: #{tpu_custom_call.1} parent=43 // pred_check_branch
          %302 = sbr.rel (%p300) target = $region52
        $region51: #{tpu_custom_call.1} parent=43 // pred_region
          %303 = dma.done %s296, 64
        $region52: #{tpu_custom_call.1} parent=43 // pred_fallthru
          _
        // Predicated region
        $region53: #{tpu_custom_call.1} parent=43 // pred_check
          %p304 = pneg %p95
        $region54: #{tpu_custom_call.1} parent=43 // pred_check_branch
          %306 = sbr.rel (%p304) target = $region56
        $region55: #{tpu_custom_call.1} parent=43 // pred_region
          %307 = dma.done [#allocation6], 6144
        $region56: #{tpu_custom_call.1} parent=43 // pred_fallthru
          _
        // Predicated region
        $region57: #{tpu_custom_call.1} parent=43 // pred_check
          %p308 = pneg %p137
        $region58: #{tpu_custom_call.1} parent=43 // pred_check_branch
          %310 = sbr.rel (%p308) target = $region60
        $region59: #{tpu_custom_call.1} parent=43 // pred_region
          %311 = dma.done [#allocation9], 1024
        $region60: #{tpu_custom_call.1} parent=43 // pred_fallthru
          _
        %s312 = sand.u32 %s35, 1
        %s313 = scalar_lea.sflag [#allocation3], %s312
        %s314 = sand.u32 %s35, 1
        %s315 = smul.addr %s314, 4
        %s316 = scalar_lea.vmem [#allocation2], %s315
        %p317 = pneg %p48
        %p318 = pneg %p45
        %s319 = sand.u32 %s27, 1
        %s320 = scalar_lea.sflag [#allocation6], %s319
        %s321 = sand.u32 %s61, 1
        %s322 = smul.addr %s321, 4
        %s323 = scalar_lea.vmem [#allocation5], %s322
        %p324 = pneg %p74
        %p325 = pneg %p71
        %p326 = pneg %p95
        %p327 = pneg %p92
        %p328 = pneg %p116
        %p329 = pneg %p113
        %p330 = pneg %p137
        %p331 = pneg %p134
        %p332 = scmp.lt.s32.totalorder %s27, 1
        %s333 = scalar_select %p332, %s27, 1
        %s334 = scalar_lea.vmem %s5, %s333
        %p335 = pneg %p163
        %p336 = pneg %p160
        %p337 = pneg %p189
        %p338 = pneg %p186
        %s339 = sand.u32 %s176, 1
        %s340 = scalar_lea.sflag [#allocation4], %s339
        %s341 = sand.u32 %s176, 1
        %s342 = smul.addr %s341, 8
        %s343 = scalar_lea.vmem [#allocation10], %s342
        %p344 = scmp.lt.s32.totalorder %s27, 1
        %s345 = scalar_select %p344, %s27, 1
        %s346 = scalar_lea.vmem %s5, %s345
        %v348 = vld [vmem:[%s299] sm:$0xf]
        %v349 = vld [vmem:[%s290] sm:$0xf]
        %vm350 = vcmask 64512
        %v352 = vsel %vm350, %v349, 0
        %vm354 = vcmask 1043456
        %v356 = vsel %vm354, %v348, 0
        %358 = vmatprep.subr.bf16.mxu0 0
        %359 = vmatpush1.bf16.msra.mxu0 %v356
        %360 = vmatprep.subr.bf16.mxu0 0
        %361 = vmatpush1.bf16.msra.mxu0 0
        %362 = vmatprep.subr.bf16.mxu0 0
        %363 = vmatpush1.bf16.msra.mxu0 0
        %364 = vmatprep.subr.bf16.mxu0 0
        %365 = vmatpush1.bf16.msra.mxu0 0
        %366 = vmatprep.subr.bf16.mxu0 0
        %367 = vmatpush1.bf16.msra.mxu0 0
        %368 = vmatprep.subr.bf16.mxu0 0
        %369 = vmatpush1.bf16.msra.mxu0 0
        %370 = vmatprep.subr.bf16.mxu0 0
        %371 = vmatpush1.bf16.msra.mxu0 0
        %372 = vmatprep.subr.bf16.mxu0 0
        %373 = vmatpush1.bf16.msra.mxu0 0
        %374 = vmatprep.subr.bf16.mxu0 0
        %375 = vmatpush1.bf16.msra.mxu0 0
        %376 = vmatprep.subr.bf16.mxu0 0
        %377 = vmatpush1.bf16.msra.mxu0 0
        %378 = vmatprep.subr.bf16.mxu0 0
        %379 = vmatpush1.bf16.msra.mxu0 0
        %380 = vmatprep.subr.bf16.mxu0 0
        %381 = vmatpush1.bf16.msra.mxu0 0
        %382 = vmatprep.subr.bf16.mxu0 0
        %383 = vmatpush1.bf16.msra.mxu0 0
        %384 = vmatprep.subr.bf16.mxu0 0
        %385 = vmatpush1.bf16.msra.mxu0 0
        %386 = vmatprep.subr.bf16.mxu0 0
        %387 = vmatpush1.bf16.msra.mxu0 0
        %388 = vmatprep.subr.bf16.mxu0 0
        %389 = vmatpush1.bf16.msra.mxu0 0
        %390 = vmatprep.mubr.bf16.mxu0 0
        %391 = vmatmul.mubr.bf16.gmra.mrb[0].mxu0 %v352
        %v392 = vpop.f32.mrb[0].mxu0
        %v393 = vadd.f32 0.0, %v392
        %v394 = vpop.f32.mrb[0].mxu0
        %v395 = vpop.f32.mrb[0].mxu0
        %v396 = vpop.f32.mrb[0].mxu0
        %397 = vdwg.mxu0
        %v398 = vpack.c.bf16 %v393, %v393
        %v399 = vld [vmem:[#allocation7] sm:$0xf]
        %v400 = vld [vmem:[#allocation7 + $0x4] sm:$0xf]
        %v401 = vld [vmem:[#allocation7 + $0x8] sm:$0xf]
        %v402 = vld [vmem:[#allocation7 + $0xc] sm:$0xf]
        %v403 = vld [vmem:[#allocation7 + $0x10] sm:$0xf]
        %v404 = vld [vmem:[#allocation7 + $0x14] sm:$0xf]
        %v405 = vld [vmem:[#allocation7 + $0x18] sm:$0xf]
        %v406 = vld [vmem:[#allocation7 + $0x1c] sm:$0xf]
        %v407 = vld [vmem:[#allocation7 + $0x20] sm:$0xf]
        %v408 = vld [vmem:[#allocation7 + $0x24] sm:$0xf]
        %v409 = vld [vmem:[#allocation7 + $0x28] sm:$0xf]
        %v410 = vld [vmem:[#allocation7 + $0x2c] sm:$0xf]
        %v411 = vld [vmem:[#allocation7 + $0x30] sm:$0xf]
        %v412 = vld [vmem:[#allocation7 + $0x34] sm:$0xf]
        %v413 = vld [vmem:[#allocation7 + $0x38] sm:$0xf]
        %v414 = vld [vmem:[#allocation7 + $0x3c] sm:$0xf]
        %v415 = vld [vmem:[#allocation7 + $0x40] sm:$0xf]
        %v416 = vld [vmem:[#allocation7 + $0x44] sm:$0xf]
        %v417 = vld [vmem:[#allocation7 + $0x48] sm:$0xf]
        %v418 = vld [vmem:[#allocation7 + $0x4c] sm:$0xf]
        %v419 = vld [vmem:[#allocation7 + $0x50] sm:$0xf]
        %v420 = vld [vmem:[#allocation7 + $0x54] sm:$0xf]
        %v421 = vld [vmem:[#allocation7 + $0x58] sm:$0xf]
        %v422 = vld [vmem:[#allocation7 + $0x5c] sm:$0xf]
        %v423 = vld [vmem:[#allocation7 + $0x60] sm:$0xf]
        %v424 = vld [vmem:[#allocation7 + $0x64] sm:$0xf]
        %v425 = vld [vmem:[#allocation7 + $0x68] sm:$0xf]
        %v426 = vld [vmem:[#allocation7 + $0x6c] sm:$0xf]
        %v427 = vld [vmem:[#allocation7 + $0x70] sm:$0xf]
        %v428 = vld [vmem:[#allocation7 + $0x74] sm:$0xf]
        %v429 = vld [vmem:[#allocation7 + $0x78] sm:$0xf]
        %v430 = vld [vmem:[#allocation7 + $0x7c] sm:$0xf]
        %v431 = vld [vmem:[%s3] sm:$0x1]
        %v433 = vlaneseq
        %v434 = vshrl.u32 %v433, 7
        %v435 = vsub.s32 0, %v434
        %v436 = vrot.slane %v431, %v435
        %v470 = vunpack.c.l.b16 %v399
        %v471 = vunpack.c.l.b16 %v400
        %v472 = vunpack.c.l.b16 %v401
        %v473 = vunpack.c.l.b16 %v402
        %v474 = vunpack.c.l.b16 %v403
        %v475 = vunpack.c.l.b16 %v404
        %v476 = vunpack.c.l.b16 %v405
        %v477 = vunpack.c.l.b16 %v406
        %v478 = vunpack.c.l.b16 %v407
        %v479 = vunpack.c.l.b16 %v408
        %v480 = vunpack.c.l.b16 %v409
        %v481 = vunpack.c.l.b16 %v410
        %v482 = vunpack.c.l.b16 %v411
        %v483 = vunpack.c.l.b16 %v412
        %v484 = vunpack.c.l.b16 %v413
        %v485 = vunpack.c.l.b16 %v414
        %v486 = vunpack.c.l.b16 %v415
        %v487 = vunpack.c.l.b16 %v416
        %v488 = vunpack.c.l.b16 %v417
        %v489 = vunpack.c.l.b16 %v418
        %v490 = vunpack.c.l.b16 %v419
        %v491 = vunpack.c.l.b16 %v420
        %v492 = vunpack.c.l.b16 %v421
        %v493 = vunpack.c.l.b16 %v422
        %v494 = vunpack.c.l.b16 %v423
        %v495 = vunpack.c.l.b16 %v424
        %v496 = vunpack.c.l.b16 %v425
        %v497 = vunpack.c.l.b16 %v426
        %v498 = vunpack.c.l.b16 %v427
        %v499 = vunpack.c.l.b16 %v428
        %v500 = vunpack.c.l.b16 %v429
        %v501 = vunpack.c.l.b16 %v430
        %v502 = vpack.c.b16 %v471, %v470
        %v503 = vpack.c.b16 %v473, %v472
        %v504 = vpack.c.b16 %v475, %v474
        %v505 = vpack.c.b16 %v477, %v476
        %v506 = vpack.c.b16 %v479, %v478
        %v507 = vpack.c.b16 %v481, %v480
        %v508 = vpack.c.b16 %v483, %v482
        %v509 = vpack.c.b16 %v485, %v484
        %v510 = vpack.c.b16 %v487, %v486
        %v511 = vpack.c.b16 %v489, %v488
        %v512 = vpack.c.b16 %v491, %v490
        %v513 = vpack.c.b16 %v493, %v492
        %v514 = vpack.c.b16 %v495, %v494
        %v515 = vpack.c.b16 %v497, %v496
        %v516 = vpack.c.b16 %v499, %v498
        %v517 = vpack.c.b16 %v501, %v500
        %534 = vmatprep.subr.bf16.mxu0 0
        %535 = vmatpush1.bf16.msra.mxu0 %v502
        %536 = vmatprep.subr.bf16.mxu0 0
        %537 = vmatpush1.bf16.msra.mxu0 %v503
        %538 = vmatprep.subr.bf16.mxu0 0
        %539 = vmatpush1.bf16.msra.mxu0 %v504
        %540 = vmatprep.subr.bf16.mxu0 0
        %541 = vmatpush1.bf16.msra.mxu0 %v505
        %542 = vmatprep.subr.bf16.mxu0 0
        %543 = vmatpush1.bf16.msra.mxu0 %v506
        %544 = vmatprep.subr.bf16.mxu0 0
        %545 = vmatpush1.bf16.msra.mxu0 %v507
        %546 = vmatprep.subr.bf16.mxu0 0
        %547 = vmatpush1.bf16.msra.mxu0 %v508
        %548 = vmatprep.subr.bf16.mxu0 0
        %549 = vmatpush1.bf16.msra.mxu0 %v509
        %550 = vmatprep.subr.bf16.mxu0 0
        %551 = vmatpush1.bf16.msra.mxu0 %v510
        %552 = vmatprep.subr.bf16.mxu0 0
        %553 = vmatpush1.bf16.msra.mxu0 %v511
        %554 = vmatprep.subr.bf16.mxu0 0
        %555 = vmatpush1.bf16.msra.mxu0 %v512
        %556 = vmatprep.subr.bf16.mxu0 0
        %557 = vmatpush1.bf16.msra.mxu0 %v513
        %558 = vmatprep.subr.bf16.mxu0 0
        %559 = vmatpush1.bf16.msra.mxu0 %v514
        %560 = vmatprep.subr.bf16.mxu0 0
        %561 = vmatpush1.bf16.msra.mxu0 %v515
        %562 = vmatprep.subr.bf16.mxu0 0
        %563 = vmatpush1.bf16.msra.mxu0 %v516
        %564 = vmatprep.subr.bf16.mxu0 0
        %565 = vmatpush1.bf16.msra.mxu0 %v517
        %566 = vmatprep.mubr.bf16.mxu0 %v348
        %567 = vmatmul.mubr.bf16.gmra.mrb[0].mxu0 %v398
        %v568 = vpop.f32.mrb[0].mxu0
        %v569 = vadd.f32 %v436, %v568
        %v570 = vpop.f32.mrb[0].mxu0
        %v571 = vpop.f32.mrb[0].mxu0
        %v572 = vpop.f32.mrb[0].mxu0
        %573 = vdwg.mxu0
        %v574 = vmax.f32 %v569, 0.0
        %v575 = vpack.c.bf16 %v574, %v574
        %v577 = vsel %vm354, %v575, 0
        %579 = vmatprep.subr.bf16.mxu0 0
        %580 = vmatpush1.bf16.msra.mxu0 %v577
        %581 = vmatprep.subr.bf16.mxu0 0
        %582 = vmatpush1.bf16.msra.mxu0 0
        %583 = vmatprep.subr.bf16.mxu0 0
        %584 = vmatpush1.bf16.msra.mxu0 0
        %585 = vmatprep.subr.bf16.mxu0 0
        %586 = vmatpush1.bf16.msra.mxu0 0
        %587 = vmatprep.subr.bf16.mxu0 0
        %588 = vmatpush1.bf16.msra.mxu0 0
        %589 = vmatprep.subr.bf16.mxu0 0
        %590 = vmatpush1.bf16.msra.mxu0 0
        %591 = vmatprep.subr.bf16.mxu0 0
        %592 = vmatpush1.bf16.msra.mxu0 0
        %593 = vmatprep.subr.bf16.mxu0 0
        %594 = vmatpush1.bf16.msra.mxu0 0
        %595 = vmatprep.subr.bf16.mxu0 0
        %596 = vmatpush1.bf16.msra.mxu0 0
        %597 = vmatprep.subr.bf16.mxu0 0
        %598 = vmatpush1.bf16.msra.mxu0 0
        %599 = vmatprep.subr.bf16.mxu0 0
        %600 = vmatpush1.bf16.msra.mxu0 0
        %601 = vmatprep.subr.bf16.mxu0 0
        %602 = vmatpush1.bf16.msra.mxu0 0
        %603 = vmatprep.subr.bf16.mxu0 0
        %604 = vmatpush1.bf16.msra.mxu0 0
        %605 = vmatprep.subr.bf16.mxu0 0
        %606 = vmatpush1.bf16.msra.mxu0 0
        %607 = vmatprep.subr.bf16.mxu0 0
        %608 = vmatpush1.bf16.msra.mxu0 0
        %609 = vmatprep.subr.bf16.mxu0 0
        %610 = vmatpush1.bf16.msra.mxu0 0
        %611 = vmatprep.mubr.bf16.mxu0 0
        %612 = vmatmul.mubr.bf16.gmra.mrb[0].mxu0 %v352
        %v613 = vpop.f32.mrb[0].mxu0
        %v614 = vadd.f32 0.0, %v613
        %v615 = vpop.f32.mrb[0].mxu0
        %v616 = vpop.f32.mrb[0].mxu0
        %v617 = vpop.f32.mrb[0].mxu0
        %618 = vdwg.mxu0
        %v619 = vpack.c.bf16 %v614, %v614
        %s620 = scalar_lea.vmem [#allocation7], 128
        %v621 = vld [vmem:[%s620] sm:$0xf]
        %v622 = vld [vmem:[%s620 + $0x4] sm:$0xf]
        %v623 = vld [vmem:[%s620 + $0x8] sm:$0xf]
        %v624 = vld [vmem:[%s620 + $0xc] sm:$0xf]
        %v625 = vld [vmem:[%s620 + $0x10] sm:$0xf]
        %v626 = vld [vmem:[%s620 + $0x14] sm:$0xf]
        %v627 = vld [vmem:[%s620 + $0x18] sm:$0xf]
        %v628 = vld [vmem:[%s620 + $0x1c] sm:$0xf]
        %v629 = vld [vmem:[%s620 + $0x20] sm:$0xf]
        %v630 = vld [vmem:[%s620 + $0x24] sm:$0xf]
        %v631 = vld [vmem:[%s620 + $0x28] sm:$0xf]
        %v632 = vld [vmem:[%s620 + $0x2c] sm:$0xf]
        %v633 = vld [vmem:[%s620 + $0x30] sm:$0xf]
        %v634 = vld [vmem:[%s620 + $0x34] sm:$0xf]
        %v635 = vld [vmem:[%s620 + $0x38] sm:$0xf]
        %v636 = vld [vmem:[%s620 + $0x3c] sm:$0xf]
        %v637 = vld [vmem:[%s620 + $0x40] sm:$0xf]
        %v638 = vld [vmem:[%s620 + $0x44] sm:$0xf]
        %v639 = vld [vmem:[%s620 + $0x48] sm:$0xf]
        %v640 = vld [vmem:[%s620 + $0x4c] sm:$0xf]
        %v641 = vld [vmem:[%s620 + $0x50] sm:$0xf]
        %v642 = vld [vmem:[%s620 + $0x54] sm:$0xf]
        %v643 = vld [vmem:[%s620 + $0x58] sm:$0xf]
        %v644 = vld [vmem:[%s620 + $0x5c] sm:$0xf]
        %v645 = vld [vmem:[%s620 + $0x60] sm:$0xf]
        %v646 = vld [vmem:[%s620 + $0x64] sm:$0xf]
        %v647 = vld [vmem:[%s620 + $0x68] sm:$0xf]
        %v648 = vld [vmem:[%s620 + $0x6c] sm:$0xf]
        %v649 = vld [vmem:[%s620 + $0x70] sm:$0xf]
        %v650 = vld [vmem:[%s620 + $0x74] sm:$0xf]
        %v651 = vld [vmem:[%s620 + $0x78] sm:$0xf]
        %v652 = vld [vmem:[%s620 + $0x7c] sm:$0xf]
        %s653 = scalar_lea.vmem %s3, 1
        %v654 = vld [vmem:[%s653] sm:$0x1]
        %v656 = vlaneseq
        %v657 = vshrl.u32 %v656, 7
        %v658 = vsub.s32 0, %v657
        %v659 = vrot.slane %v654, %v658
        %v693 = vunpack.c.l.b16 %v621
        %v694 = vunpack.c.l.b16 %v622
        %v695 = vunpack.c.l.b16 %v623
        %v696 = vunpack.c.l.b16 %v624
        %v697 = vunpack.c.l.b16 %v625
        %v698 = vunpack.c.l.b16 %v626
        %v699 = vunpack.c.l.b16 %v627
        %v700 = vunpack.c.l.b16 %v628
        %v701 = vunpack.c.l.b16 %v629
        %v702 = vunpack.c.l.b16 %v630
        %v703 = vunpack.c.l.b16 %v631
        %v704 = vunpack.c.l.b16 %v632
        %v705 = vunpack.c.l.b16 %v633
        %v706 = vunpack.c.l.b16 %v634
        %v707 = vunpack.c.l.b16 %v635
        %v708 = vunpack.c.l.b16 %v636
        %v709 = vunpack.c.l.b16 %v637
        %v710 = vunpack.c.l.b16 %v638
        %v711 = vunpack.c.l.b16 %v639
        %v712 = vunpack.c.l.b16 %v640
        %v713 = vunpack.c.l.b16 %v641
        %v714 = vunpack.c.l.b16 %v642
        %v715 = vunpack.c.l.b16 %v643
        %v716 = vunpack.c.l.b16 %v644
        %v717 = vunpack.c.l.b16 %v645
        %v718 = vunpack.c.l.b16 %v646
        %v719 = vunpack.c.l.b16 %v647
        %v720 = vunpack.c.l.b16 %v648
        %v721 = vunpack.c.l.b16 %v649
        %v722 = vunpack.c.l.b16 %v650
        %v723 = vunpack.c.l.b16 %v651
        %v724 = vunpack.c.l.b16 %v652
        %v725 = vpack.c.b16 %v694, %v693
        %v726 = vpack.c.b16 %v696, %v695
        %v727 = vpack.c.b16 %v698, %v697
        %v728 = vpack.c.b16 %v700, %v699
        %v729 = vpack.c.b16 %v702, %v701
        %v730 = vpack.c.b16 %v704, %v703
        %v731 = vpack.c.b16 %v706, %v705
        %v732 = vpack.c.b16 %v708, %v707
        %v733 = vpack.c.b16 %v710, %v709
        %v734 = vpack.c.b16 %v712, %v711
        %v735 = vpack.c.b16 %v714, %v713
        %v736 = vpack.c.b16 %v716, %v715
        %v737 = vpack.c.b16 %v718, %v717
        %v738 = vpack.c.b16 %v720, %v719
        %v739 = vpack.c.b16 %v722, %v721
        %v740 = vpack.c.b16 %v724, %v723
        %757 = vmatprep.subr.bf16.mxu0 0
        %758 = vmatpush1.bf16.msra.mxu0 %v725
        %759 = vmatprep.subr.bf16.mxu0 0
        %760 = vmatpush1.bf16.msra.mxu0 %v726
        %761 = vmatprep.subr.bf16.mxu0 0
        %762 = vmatpush1.bf16.msra.mxu0 %v727
        %763 = vmatprep.subr.bf16.mxu0 0
        %764 = vmatpush1.bf16.msra.mxu0 %v728
        %765 = vmatprep.subr.bf16.mxu0 0
        %766 = vmatpush1.bf16.msra.mxu0 %v729
        %767 = vmatprep.subr.bf16.mxu0 0
        %768 = vmatpush1.bf16.msra.mxu0 %v730
        %769 = vmatprep.subr.bf16.mxu0 0
        %770 = vmatpush1.bf16.msra.mxu0 %v731
        %771 = vmatprep.subr.bf16.mxu0 0
        %772 = vmatpush1.bf16.msra.mxu0 %v732
        %773 = vmatprep.subr.bf16.mxu0 0
        %774 = vmatpush1.bf16.msra.mxu0 %v733
        %775 = vmatprep.subr.bf16.mxu0 0
        %776 = vmatpush1.bf16.msra.mxu0 %v734
        %777 = vmatprep.subr.bf16.mxu0 0
        %778 = vmatpush1.bf16.msra.mxu0 %v735
        %779 = vmatprep.subr.bf16.mxu0 0
        %780 = vmatpush1.bf16.msra.mxu0 %v736
        %781 = vmatprep.subr.bf16.mxu0 0
        %782 = vmatpush1.bf16.msra.mxu0 %v737
        %783 = vmatprep.subr.bf16.mxu0 0
        %784 = vmatpush1.bf16.msra.mxu0 %v738
        %785 = vmatprep.subr.bf16.mxu0 0
        %786 = vmatpush1.bf16.msra.mxu0 %v739
        %787 = vmatprep.subr.bf16.mxu0 0
        %788 = vmatpush1.bf16.msra.mxu0 %v740
        %789 = vmatprep.mubr.bf16.mxu0 %v575
        %790 = vmatmul.mubr.bf16.gmra.mrb[0].mxu0 %v619
        %v791 = vpop.f32.mrb[0].mxu0
        %v792 = vadd.f32 %v659, %v791
        %v793 = vpop.f32.mrb[0].mxu0
        %v794 = vpop.f32.mrb[0].mxu0
        %v795 = vpop.f32.mrb[0].mxu0
        %796 = vdwg.mxu0
        %v797 = vmax.f32 %v792, 0.0
        %v798 = vpack.c.bf16 %v797, %v797
        %v800 = vsel %vm354, %v798, 0
        %802 = vmatprep.subr.bf16.mxu0 0
        %803 = vmatpush1.bf16.msra.mxu0 %v800
        %804 = vmatprep.subr.bf16.mxu0 0
        %805 = vmatpush1.bf16.msra.mxu0 0
        %806 = vmatprep.subr.bf16.mxu0 0
        %807 = vmatpush1.bf16.msra.mxu0 0
        %808 = vmatprep.subr.bf16.mxu0 0
        %809 = vmatpush1.bf16.msra.mxu0 0
        %810 = vmatprep.subr.bf16.mxu0 0
        %811 = vmatpush1.bf16.msra.mxu0 0
        %812 = vmatprep.subr.bf16.mxu0 0
        %813 = vmatpush1.bf16.msra.mxu0 0
        %814 = vmatprep.subr.bf16.mxu0 0
        %815 = vmatpush1.bf16.msra.mxu0 0
        %816 = vmatprep.subr.bf16.mxu0 0
        %817 = vmatpush1.bf16.msra.mxu0 0
        %818 = vmatprep.subr.bf16.mxu0 0
        %819 = vmatpush1.bf16.msra.mxu0 0
        %820 = vmatprep.subr.bf16.mxu0 0
        %821 = vmatpush1.bf16.msra.mxu0 0
        %822 = vmatprep.subr.bf16.mxu0 0
        %823 = vmatpush1.bf16.msra.mxu0 0
        %824 = vmatprep.subr.bf16.mxu0 0
        %825 = vmatpush1.bf16.msra.mxu0 0
        %826 = vmatprep.subr.bf16.mxu0 0
        %827 = vmatpush1.bf16.msra.mxu0 0
        %828 = vmatprep.subr.bf16.mxu0 0
        %829 = vmatpush1.bf16.msra.mxu0 0
        %830 = vmatprep.subr.bf16.mxu0 0
        %831 = vmatpush1.bf16.msra.mxu0 0
        %832 = vmatprep.subr.bf16.mxu0 0
        %833 = vmatpush1.bf16.msra.mxu0 0
        %834 = vmatprep.mubr.bf16.mxu0 0
        %835 = vmatmul.mubr.bf16.gmra.mrb[0].mxu0 %v352
        %v836 = vpop.f32.mrb[0].mxu0
        %v837 = vadd.f32 0.0, %v836
        %v838 = vpop.f32.mrb[0].mxu0
        %v839 = vpop.f32.mrb[0].mxu0
        %v840 = vpop.f32.mrb[0].mxu0
        %841 = vdwg.mxu0
        %v842 = vpack.c.bf16 %v837, %v837
        %s843 = scalar_lea.vmem [#allocation7], 256
        %v844 = vld [vmem:[%s843] sm:$0xf]
        %v845 = vld [vmem:[%s843 + $0x4] sm:$0xf]
        %v846 = vld [vmem:[%s843 + $0x8] sm:$0xf]
        %v847 = vld [vmem:[%s843 + $0xc] sm:$0xf]
        %v848 = vld [vmem:[%s843 + $0x10] sm:$0xf]
        %v849 = vld [vmem:[%s843 + $0x14] sm:$0xf]
        %v850 = vld [vmem:[%s843 + $0x18] sm:$0xf]
        %v851 = vld [vmem:[%s843 + $0x1c] sm:$0xf]
        %v852 = vld [vmem:[%s843 + $0x20] sm:$0xf]
        %v853 = vld [vmem:[%s843 + $0x24] sm:$0xf]
        %v854 = vld [vmem:[%s843 + $0x28] sm:$0xf]
        %v855 = vld [vmem:[%s843 + $0x2c] sm:$0xf]
        %v856 = vld [vmem:[%s843 + $0x30] sm:$0xf]
        %v857 = vld [vmem:[%s843 + $0x34] sm:$0xf]
        %v858 = vld [vmem:[%s843 + $0x38] sm:$0xf]
        %v859 = vld [vmem:[%s843 + $0x3c] sm:$0xf]
        %v860 = vld [vmem:[%s843 + $0x40] sm:$0xf]
        %v861 = vld [vmem:[%s843 + $0x44] sm:$0xf]
        %v862 = vld [vmem:[%s843 + $0x48] sm:$0xf]
        %v863 = vld [vmem:[%s843 + $0x4c] sm:$0xf]
        %v864 = vld [vmem:[%s843 + $0x50] sm:$0xf]
        %v865 = vld [vmem:[%s843 + $0x54] sm:$0xf]
        %v866 = vld [vmem:[%s843 + $0x58] sm:$0xf]
        %v867 = vld [vmem:[%s843 + $0x5c] sm:$0xf]
        %v868 = vld [vmem:[%s843 + $0x60] sm:$0xf]
        %v869 = vld [vmem:[%s843 + $0x64] sm:$0xf]
        %v870 = vld [vmem:[%s843 + $0x68] sm:$0xf]
        %v871 = vld [vmem:[%s843 + $0x6c] sm:$0xf]
        %v872 = vld [vmem:[%s843 + $0x70] sm:$0xf]
        %v873 = vld [vmem:[%s843 + $0x74] sm:$0xf]
        %v874 = vld [vmem:[%s843 + $0x78] sm:$0xf]
        %v875 = vld [vmem:[%s843 + $0x7c] sm:$0xf]
        %s876 = scalar_lea.vmem %s3, 2
        %v877 = vld [vmem:[%s876] sm:$0x1]
        %v879 = vlaneseq
        %v880 = vshrl.u32 %v879, 7
        %v881 = vsub.s32 0, %v880
        %v882 = vrot.slane %v877, %v881
        %v916 = vunpack.c.l.b16 %v844
        %v917 = vunpack.c.l.b16 %v845
        %v918 = vunpack.c.l.b16 %v846
        %v919 = vunpack.c.l.b16 %v847
        %v920 = vunpack.c.l.b16 %v848
        %v921 = vunpack.c.l.b16 %v849
        %v922 = vunpack.c.l.b16 %v850
        %v923 = vunpack.c.l.b16 %v851
        %v924 = vunpack.c.l.b16 %v852
        %v925 = vunpack.c.l.b16 %v853
        %v926 = vunpack.c.l.b16 %v854
        %v927 = vunpack.c.l.b16 %v855
        %v928 = vunpack.c.l.b16 %v856
        %v929 = vunpack.c.l.b16 %v857
        %v930 = vunpack.c.l.b16 %v858
        %v931 = vunpack.c.l.b16 %v859
        %v932 = vunpack.c.l.b16 %v860
        %v933 = vunpack.c.l.b16 %v861
        %v934 = vunpack.c.l.b16 %v862
        %v935 = vunpack.c.l.b16 %v863
        %v936 = vunpack.c.l.b16 %v864
        %v937 = vunpack.c.l.b16 %v865
        %v938 = vunpack.c.l.b16 %v866
        %v939 = vunpack.c.l.b16 %v867
        %v940 = vunpack.c.l.b16 %v868
        %v941 = vunpack.c.l.b16 %v869
        %v942 = vunpack.c.l.b16 %v870
        %v943 = vunpack.c.l.b16 %v871
        %v944 = vunpack.c.l.b16 %v872
        %v945 = vunpack.c.l.b16 %v873
        %v946 = vunpack.c.l.b16 %v874
        %v947 = vunpack.c.l.b16 %v875
        %v948 = vpack.c.b16 %v917, %v916
        %v949 = vpack.c.b16 %v919, %v918
        %v950 = vpack.c.b16 %v921, %v920
        %v951 = vpack.c.b16 %v923, %v922
        %v952 = vpack.c.b16 %v925, %v924
        %v953 = vpack.c.b16 %v927, %v926
        %v954 = vpack.c.b16 %v929, %v928
        %v955 = vpack.c.b16 %v931, %v930
        %v956 = vpack.c.b16 %v933, %v932
        %v957 = vpack.c.b16 %v935, %v934
        %v958 = vpack.c.b16 %v937, %v936
        %v959 = vpack.c.b16 %v939, %v938
        %v960 = vpack.c.b16 %v941, %v940
        %v961 = vpack.c.b16 %v943, %v942
        %v962 = vpack.c.b16 %v945, %v944
        %v963 = vpack.c.b16 %v947, %v946
        %980 = vmatprep.subr.bf16.mxu0 0
        %981 = vmatpush1.bf16.msra.mxu0 %v948
        %982 = vmatprep.subr.bf16.mxu0 0
        %983 = vmatpush1.bf16.msra.mxu0 %v949
        %984 = vmatprep.subr.bf16.mxu0 0
        %985 = vmatpush1.bf16.msra.mxu0 %v950
        %986 = vmatprep.subr.bf16.mxu0 0
        %987 = vmatpush1.bf16.msra.mxu0 %v951
        %988 = vmatprep.subr.bf16.mxu0 0
        %989 = vmatpush1.bf16.msra.mxu0 %v952
        %990 = vmatprep.subr.bf16.mxu0 0
        %991 = vmatpush1.bf16.msra.mxu0 %v953
        %992 = vmatprep.subr.bf16.mxu0 0
        %993 = vmatpush1.bf16.msra.mxu0 %v954
        %994 = vmatprep.subr.bf16.mxu0 0
        %995 = vmatpush1.bf16.msra.mxu0 %v955
        %996 = vmatprep.subr.bf16.mxu0 0
        %997 = vmatpush1.bf16.msra.mxu0 %v956
        %998 = vmatprep.subr.bf16.mxu0 0
        %999 = vmatpush1.bf16.msra.mxu0 %v957
        %1000 = vmatprep.subr.bf16.mxu0 0
        %1001 = vmatpush1.bf16.msra.mxu0 %v958
        %1002 = vmatprep.subr.bf16.mxu0 0
        %1003 = vmatpush1.bf16.msra.mxu0 %v959
        %1004 = vmatprep.subr.bf16.mxu0 0
        %1005 = vmatpush1.bf16.msra.mxu0 %v960
        %1006 = vmatprep.subr.bf16.mxu0 0
        %1007 = vmatpush1.bf16.msra.mxu0 %v961
        %1008 = vmatprep.subr.bf16.mxu0 0
        %1009 = vmatpush1.bf16.msra.mxu0 %v962
        %1010 = vmatprep.subr.bf16.mxu0 0
        %1011 = vmatpush1.bf16.msra.mxu0 %v963
        %1012 = vmatprep.mubr.bf16.mxu0 %v798
        %1013 = vmatmul.mubr.bf16.gmra.mrb[0].mxu0 %v842
        %v1014 = vpop.f32.mrb[0].mxu0
        %v1015 = vadd.f32 %v882, %v1014
        %v1016 = vpop.f32.mrb[0].mxu0
        %v1017 = vpop.f32.mrb[0].mxu0
        %v1018 = vpop.f32.mrb[0].mxu0
        %1019 = vdwg.mxu0
        %v1020 = vmax.f32 %v1015, 0.0
        %v1021 = vpack.c.bf16 %v1020, %v1020
        %v1022 = vld [vmem:[#allocation8] sm:$0xf]
        %v1023 = vld [vmem:[#allocation8 + $0x4] sm:$0xf]
        %v1024 = vld [vmem:[#allocation8 + $0x8] sm:$0xf]
        %v1025 = vld [vmem:[#allocation8 + $0xc] sm:$0xf]
        %v1026 = vld [vmem:[#allocation8 + $0x10] sm:$0xf]
        %v1027 = vld [vmem:[#allocation8 + $0x14] sm:$0xf]
        %v1028 = vld [vmem:[#allocation8 + $0x18] sm:$0xf]
        %v1029 = vld [vmem:[#allocation8 + $0x1c] sm:$0xf]
        %v1030 = vld [vmem:[#allocation8 + $0x20] sm:$0xf]
        %v1031 = vld [vmem:[#allocation8 + $0x24] sm:$0xf]
        %v1032 = vld [vmem:[#allocation8 + $0x28] sm:$0xf]
        %v1033 = vld [vmem:[#allocation8 + $0x2c] sm:$0xf]
        %v1034 = vld [vmem:[#allocation8 + $0x30] sm:$0xf]
        %v1035 = vld [vmem:[#allocation8 + $0x34] sm:$0xf]
        %v1036 = vld [vmem:[#allocation8 + $0x38] sm:$0xf]
        %v1037 = vld [vmem:[#allocation8 + $0x3c] sm:$0xf]
        %v1038 = vld [vmem:[%s346] sm:$0x1]
        %v1040 = vlaneseq
        %v1041 = vshrl.u32 %v1040, 7
        %v1042 = vsub.s32 0, %v1041
        %v1043 = vrot.slane %v1038, %v1042
        %v1061 = vunpack.c.l.b16 %v1022
        %v1062 = vunpack.c.l.b16 %v1023
        %v1063 = vunpack.c.l.b16 %v1024
        %v1064 = vunpack.c.l.b16 %v1025
        %v1065 = vunpack.c.l.b16 %v1026
        %v1066 = vunpack.c.l.b16 %v1027
        %v1067 = vunpack.c.l.b16 %v1028
        %v1068 = vunpack.c.l.b16 %v1029
        %v1069 = vunpack.c.l.b16 %v1030
        %v1070 = vunpack.c.l.b16 %v1031
        %v1071 = vunpack.c.l.b16 %v1032
        %v1072 = vunpack.c.l.b16 %v1033
        %v1073 = vunpack.c.l.b16 %v1034
        %v1074 = vunpack.c.l.b16 %v1035
        %v1075 = vunpack.c.l.b16 %v1036
        %v1076 = vunpack.c.l.b16 %v1037
        %v1077 = vpack.c.b16 %v1062, %v1061
        %v1078 = vpack.c.b16 %v1064, %v1063
        %v1079 = vpack.c.b16 %v1066, %v1065
        %v1080 = vpack.c.b16 %v1068, %v1067
        %v1081 = vpack.c.b16 %v1070, %v1069
        %v1082 = vpack.c.b16 %v1072, %v1071
        %v1083 = vpack.c.b16 %v1074, %v1073
        %v1084 = vpack.c.b16 %v1076, %v1075
        %1093 = vmatprep.subr.bf16.mxu0 0
        %1094 = vmatpush1.bf16.msra.mxu0 %v1077
        %1095 = vmatprep.subr.bf16.mxu0 0
        %1096 = vmatpush1.bf16.msra.mxu0 %v1078
        %1097 = vmatprep.subr.bf16.mxu0 0
        %1098 = vmatpush1.bf16.msra.mxu0 %v1079
        %1099 = vmatprep.subr.bf16.mxu0 0
        %1100 = vmatpush1.bf16.msra.mxu0 %v1080
        %1101 = vmatprep.subr.bf16.mxu0 0
        %1102 = vmatpush1.bf16.msra.mxu0 %v1081
        %1103 = vmatprep.subr.bf16.mxu0 0
        %1104 = vmatpush1.bf16.msra.mxu0 %v1082
        %1105 = vmatprep.subr.bf16.mxu0 0
        %1106 = vmatpush1.bf16.msra.mxu0 %v1083
        %1107 = vmatprep.subr.bf16.mxu0 0
        %1108 = vmatpush1.bf16.msra.mxu0 %v1084
        %1109 = vmatprep.subr.bf16.mxu0 0
        %1110 = vmatpush1.bf16.msra.mxu0 0
        %1111 = vmatprep.subr.bf16.mxu0 0
        %1112 = vmatpush1.bf16.msra.mxu0 0
        %1113 = vmatprep.subr.bf16.mxu0 0
        %1114 = vmatpush1.bf16.msra.mxu0 0
        %1115 = vmatprep.subr.bf16.mxu0 0
        %1116 = vmatpush1.bf16.msra.mxu0 0
        %1117 = vmatprep.subr.bf16.mxu0 0
        %1118 = vmatpush1.bf16.msra.mxu0 0
        %1119 = vmatprep.subr.bf16.mxu0 0
        %1120 = vmatpush1.bf16.msra.mxu0 0
        %1121 = vmatprep.subr.bf16.mxu0 0
        %1122 = vmatpush1.bf16.msra.mxu0 0
        %1123 = vmatprep.subr.bf16.mxu0 0
        %1124 = vmatpush1.bf16.msra.mxu0 0
        %1125 = vmatprep.mubr.bf16.mxu0 0
        %1126 = vmatmul.mubr.bf16.gmra.mrb[0].mxu0 %v1021
        %v1127 = vpop.f32.mrb[0].mxu0
        %v1128 = vadd.f32 %v1043, %v1127
        %v1129 = vpop.f32.mrb[0].mxu0
        %v1130 = vpop.f32.mrb[0].mxu0
        %v1131 = vpop.f32.mrb[0].mxu0
        %1132 = vdwg.mxu0
        %1133 = vst [vmem:[%s343] sm:$0xff] %v1128
        %s1134 = sand.u32 %s176, 1
        %s1135 = scalar_lea.sflag [#allocation4], %s1134
        %s1136 = sand.u32 %s176, 1
        %s1137 = smul.addr %s1136, 8
        %s1138 = scalar_lea.vmem [#allocation10], %s1137
        // Predicated region
        $region61: #{tpu_custom_call.1} parent=43 // pred_check
          %p1139 = pneg %p186
        $region62: #{tpu_custom_call.1} parent=43 // pred_check_branch
          %1141 = sbr.rel (%p1139) target = $region64
        $region63: #{tpu_custom_call.1} parent=43 // pred_region
          %s1143 = ssub.s32 128, 128
          %1144 = vsyncadd %s1135, %s1143
          %s1145 = smul.addr %s27, 128
          %s1146 = scalar_lea.hbm %s6, %s1145
          %s1148 = sshll.u32 %s1138, 4
          %s1149 = int_to_ptr.vmem [resolvable:$true] %s1148
          %1151 = dma.vmem_to_hbm [thread:$0]  %s1149, 128, %s1146, %s1135
        $region64: #{tpu_custom_call.1} parent=43 // pred_fallthru
          _
      $region44: #{tpu_custom_call.1} parent=5 // pred_fallthru
        _
      %p1152 = scmp.le.s32.totalorder 2, %s22
      // Predicated region
      $region65: #{tpu_custom_call.1} parent=5 // pred_check
        %p1153 = pneg %p1152
      $region66: #{tpu_custom_call.1} parent=5 // pred_check_branch
        %1155 = sbr.rel (%p1153) target = $region68
      $region67: #{tpu_custom_call.1} parent=5 // pred_region
        %s1156 = ssub.s32 %s22, 2
        // Predicated region
        $region69: #{tpu_custom_call.1} parent=67 // pred_check
          %p1157 = pneg %p192
        $region70: #{tpu_custom_call.1} parent=67 // pred_check_branch
          %1159 = sbr.rel (%p1157) target = $region72
        $region71: #{tpu_custom_call.1} parent=67 // pred_region
          %s1160 = sand.u32 %s177, 1
          %s1161 = scalar_lea.sflag [#allocation4], %s1160
          %s1162 = sand.u32 %s177, 1
          %s1163 = smul.addr %s1162, 8
          %s1164 = scalar_lea.vmem [#allocation10], %s1163
          %1165 = dma.done %s1161, 128
        $region72: #{tpu_custom_call.1} parent=67 // pred_fallthru
          _
      $region68: #{tpu_custom_call.1} parent=5 // pred_fallthru
        _
    $region6: #{tpu_custom_call.1} parent=1 // loop_footer
      %s26 = sadd.s32 1, %s22
    $region7: #{tpu_custom_call.1} parent=1 // loop_footer_branch
      %21 = sbr.rel target = $region3
    $region8: #{tpu_custom_call.1} parent=1 // loop_exit
      _
    %1166 = vsyncpa [#allocation3], 1
    %s1167 = scalar_lea.sflag [#allocation3], 1
    %1168 = vsyncpa %s1167, 1
    %1169 = vsyncpa [#allocation6], 1
    %s1170 = scalar_lea.sflag [#allocation6], 1
    %1171 = vsyncpa %s1170, 1
    %1172 = vsyncpa [#allocation9], 1
    %1173 = vsyncpa [#allocation4], 1
    %s1174 = scalar_lea.sflag [#allocation4], 1
    %1175 = vsyncpa %s1174, 1

</llo_original>
